<compile_context>
chip_gen: v6e
topology: v6e:2x2x1
jax: 0.10.0
libtpu: 0.0.40
codegen_flags: <defaults>
</compile_context>

<pallas_src>
import math
import jax
import jax.numpy as jnp
from jax.experimental import pallas as pl
from jax.experimental.pallas import tpu as pltpu


def _round_up(x, m):
    return (x + m - 1) // m * m


# --------------------------- kernels ---------------------------

def lin1_relu_kernel(x_ref, w1_ref, h_ref):
    # h = relu(X @ W1); bf16 operands, f32 accumulation on the MXU.
    acc = jnp.dot(x_ref[...], w1_ref[...], preferred_element_type=jnp.float32)
    h_ref[...] = jnp.maximum(acc, 0.0).astype(h_ref.dtype)


def make_hop_kernel(alpha):
    # One APPNP hop on a row tile: o = A_scaled @ x + alpha * h,
    # where A_scaled already carries the (1 - alpha) factor (folded in wrapper).
    def hop_kernel(a_ref, x_ref, h_ref, o_ref):
        acc = jnp.dot(a_ref[...], x_ref[...], preferred_element_type=jnp.float32)
        acc = acc + alpha * h_ref[...].astype(jnp.float32)
        o_ref[...] = acc.astype(o_ref.dtype)
    return hop_kernel


def make_lin2_logsoftmax_kernel(n_classes):
    # logits = x @ W2^T (padded to 128 classes), masked log_softmax over real classes.
    def kernel(x_ref, w2t_ref, o_ref):
        logits = jnp.dot(x_ref[...], w2t_ref[...],
                         preferred_element_type=jnp.float32)
        col = jax.lax.broadcasted_iota(jnp.int32, logits.shape, 1)
        logits = jnp.where(col < n_classes, logits,
                           jnp.full_like(logits, -1e30))
        m = jnp.max(logits, axis=-1, keepdims=True)
        z = logits - m
        lse = jnp.log(jnp.sum(jnp.exp(z), axis=-1, keepdims=True))
        o_ref[...] = (z - lse).astype(o_ref.dtype)
    return kernel


# --------------------------- wrapper ---------------------------

def _hop_vmem_limit(tm, n_pad, hp):
    # Double-buffered bf16 tiles: A row tile + resident x + h tile + out tile.
    need = 2 * 2 * (tm * n_pad + n_pad * hp + 2 * tm * hp)
    if need <= 28 * 1024 * 1024:
        return None  # default scoped limit is enough (small problems / demo)
    # TODO(synk): query pltpu.get_tpu_info() to pick a per-generation cap;
    # 64 MiB is the safe upper bound across v5e/v6e/v7x.
    return min(need + (4 << 20), 64 * 1024 * 1024)


def appnp_forward(attr_idx, edge_idx, n, d, w1, w2, *, k_hops, alpha):
    """Glue: densify sparse inputs, GCN-normalize adjacency, run the 3 stages."""
    n_hidden = w1.shape[1]
    n_classes = w2.shape[0]

    # Padded, lane-dense sizes.
    hp = _round_up(n_hidden, 128)
    cp = _round_up(n_classes, 128)
    if n <= 512:
        tm = _round_up(n, 8)
        n_pad = tm
    else:
        tm = 512
        n_pad = _round_up(n, tm)
    n_tiles = n_pad // tm

    # Dense attribute matrix (spmm with value = ones), padded rows, bf16 operand.
    x_attr = jnp.zeros((n, d), jnp.float32).at[attr_idx[0], attr_idx[1]].set(1.0)
    x_attr = jnp.pad(x_attr, ((0, n_pad - n), (0, 0))).astype(jnp.bfloat16)

    # Adjacency: A + I with duplicate edges summed, symmetric GCN normalization:
    #   A_hat = D^{-1/2} (A + I) D^{-1/2};  fold (1 - alpha) in here (free).
    adj = jnp.zeros((n, n), jnp.float32).at[edge_idx[0], edge_idx[1]].add(1.0)
    adj = adj + jnp.eye(n, dtype=jnp.float32)
    deg = jnp.sum(adj, axis=1)
    dinv = jax.lax.rsqrt(deg)
    a_hat = (1.0 - alpha) * (dinv[:, None] * adj * dinv[None, :])
    a_hat = jnp.pad(a_hat, ((0, n_pad - n), (0, n_pad - n))).astype(jnp.bfloat16)

    # Padded bf16 weights (zero padding is exact: relu(0)=0, zero rows/cols add 0).
    w1_p = jnp.pad(w1, ((0, 0), (0, hp - n_hidden))).astype(jnp.bfloat16)
    w2t_p = jnp.pad(w2.T, ((0, hp - n_hidden), (0, cp - n_classes))).astype(jnp.bfloat16)

    par = ("parallel",)  # row-tile axis: independent -> megacore-shardable (v7x)

    # ---- stage 1: h = relu(X @ W1), row-tiled -------------------------------
    h = pl.pallas_call(
        lin1_relu_kernel,
        out_shape=jax.ShapeDtypeStruct((n_pad, hp), jnp.bfloat16),
        grid=(n_tiles,),
        in_specs=[
            pl.BlockSpec((tm, d), lambda i: (i, 0)),
            pl.BlockSpec((d, hp), lambda i: (0, 0)),
        ],
        out_specs=pl.BlockSpec((tm, hp), lambda i: (i, 0)),
        compiler_params=pltpu.CompilerParams(dimension_semantics=par),
        cost_estimate=pl.CostEstimate(
            flops=2 * n_pad * d * hp, transcendentals=0,
            bytes_accessed=2 * (n_pad * d + d * hp + n_pad * hp)),
    )(x_attr, w1_p)

    # TODO(synk): training-mode dropout (p=0.5) would need pltpu.prng_* masking;
    # eval mode -> identity.

    # ---- stage 2: K propagation hops in hidden space ------------------------
    # Chain of per-hop calls; each hop streams (tm, n_pad) rows of A_hat while the
    # previous x (n_pad, hp) stays VMEM-resident across the row tiles.
    hop_call = pl.pallas_call(
        make_hop_kernel(alpha),
        out_shape=jax.ShapeDtypeStruct((n_pad, hp), jnp.bfloat16),
        grid=(n_tiles,),
        in_specs=[
            pl.BlockSpec((tm, n_pad), lambda i: (i, 0)),   # A_hat row tile (streamed)
            pl.BlockSpec((n_pad, hp), lambda i: (0, 0)),   # previous x (resident)
            pl.BlockSpec((tm, hp), lambda i: (i, 0)),      # teleport term h
        ],
        out_specs=pl.BlockSpec((tm, hp), lambda i: (i, 0)),
        compiler_params=pltpu.CompilerParams(
            dimension_semantics=par,
            vmem_limit_bytes=_hop_vmem_limit(tm, n_pad, hp)),
        cost_estimate=pl.CostEstimate(
            flops=2 * n_pad * n_pad * hp + 2 * n_pad * hp, transcendentals=0,
            bytes_accessed=2 * (n_pad * n_pad + n_tiles * n_pad * hp
                                + 2 * n_pad * hp)),
    )
    x = h
    for _ in range(k_hops):
        x = hop_call(a_hat, x, h)

    # ---- stage 3: out = log_softmax(x @ W2^T), lane-dense class dim ----------
    out = pl.pallas_call(
        make_lin2_logsoftmax_kernel(n_classes),
        out_shape=jax.ShapeDtypeStruct((n_pad, cp), jnp.float32),
        grid=(n_tiles,),
        in_specs=[
            pl.BlockSpec((tm, hp), lambda i: (i, 0)),
            pl.BlockSpec((hp, cp), lambda i: (0, 0)),
        ],
        out_specs=pl.BlockSpec((tm, cp), lambda i: (i, 0)),
        compiler_params=pltpu.CompilerParams(dimension_semantics=par),
        cost_estimate=pl.CostEstimate(
            flops=2 * n_pad * hp * cp + 5 * n_pad * cp,
            transcendentals=n_pad * cp + n_pad,
            bytes_accessed=2 * (n_pad * hp + hp * cp) + 4 * n_pad * cp),
    )(x, w2t_p)

    # TODO(synk): for realistic graphs (nnz << n^2) a CSR SpMM propagation with
    # PrefetchScalarGridSpec + manual DMA gathers would replace the dense A_hat.
    return out[:n, :n_classes]


def init_params(key, n_features, n_hidden, n_classes):
    """Deterministic init matching the module's parameter shapes."""
    k1, k2 = jax.random.split(key)
    # SparseLinear.weight: (in_features, out_features), kaiming_uniform(fan_out, a=sqrt(5))
    gain = math.sqrt(2.0 / (1.0 + 5.0))
    bound1 = gain * math.sqrt(3.0 / n_hidden)
    w1 = jax.random.uniform(k1, (n_features, n_hidden), jnp.float32,
                            minval=-bound1, maxval=bound1)
    # nn.Linear.weight: (out_features, in_features), kaiming_uniform(a=sqrt(5)) on fan_in
    bound2 = 1.0 / math.sqrt(n_hidden)
    w2 = jax.random.uniform(k2, (n_classes, n_hidden), jnp.float32,
                            minval=-bound2, maxval=bound2)
    return w1, w2


if __name__ == "__main__":
    key = jax.random.PRNGKey(0)
    k_param, k_attr_r, k_attr_c, k_edge_s, k_edge_d = jax.random.split(key, 5)

    # Small shapes consistent with the forward signature (attr_idx, edge_idx, n, d).
    n = 64            # number of nodes
    d = 32            # number of features
    n_hidden = 32
    n_classes = 8
    k_hops = 3
    alpha = 0.1

    w1, w2 = init_params(k_param, d, n_hidden, n_classes)

    # Sparse attribute indices: (2, nnz_attr) — rows in [0, n), cols in [0, d).
    nnz_attr = 256
    attr_idx = jnp.stack([
        jax.random.randint(k_attr_r, (nnz_attr,), 0, n),
        jax.random.randint(k_attr_c, (nnz_attr,), 0, d),
    ]).astype(jnp.int32)

    # Edge indices: (2, nnz_edge) — src/dst in [0, n).
    nnz_edge = 192
    edge_idx = jnp.stack([
        jax.random.randint(k_edge_s, (nnz_edge,), 0, n),
        jax.random.randint(k_edge_d, (nnz_edge,), 0, n),
    ]).astype(jnp.int32)

    out = appnp_forward(attr_idx, edge_idx, n, d, w1, w2,
                        k_hops=k_hops, alpha=alpha)
    out = jax.block_until_ready(out)

    assert out.shape == (n, n_classes)
    # rows of log_softmax must exp-sum to 1
    assert bool(jnp.allclose(jnp.sum(jnp.exp(out), axis=1), 1.0, atol=1e-4))
    print("KERNEL_OK")
</pallas_src>

<mosaic_0001>
module attributes {stable_mosaic.version = 11 : i64} {
  func.func @lin1_relu_kernel(%arg0: i32, %arg1: memref<64x32xbf16, #tpu.memory_space<vmem>>, %arg2: memref<32x128xbf16, #tpu.memory_space<vmem>>, %arg3: memref<64x128xbf16, #tpu.memory_space<vmem>>) attributes {dimension_semantics = [#tpu.dimension_semantics<parallel>], iteration_bounds = array<i64: 1>, scalar_prefetch = 0 : i64, scratch_operands = 0 : i64, tpu.core_type = #tpu.core_type<tc>, window_params = [{transform_indices = @transform_0, window_bounds = array<i64: 64, 32>}, {pipeline_mode = #tpu.pipeline_mode<synchronous>, transform_indices = @transform_1, window_bounds = array<i64: 32, 128>}, {transform_indices = @transform_2, window_bounds = array<i64: 64, 128>}]} {
    %c0 = arith.constant 0 : index
    %c0_0 = arith.constant 0 : index
    %0 = vector.load %arg1[%c0, %c0_0] : memref<64x32xbf16, #tpu.memory_space<vmem>>, vector<64x32xbf16>
    %c0_1 = arith.constant 0 : index
    %c0_2 = arith.constant 0 : index
    %1 = vector.load %arg2[%c0_1, %c0_2] : memref<32x128xbf16, #tpu.memory_space<vmem>>, vector<32x128xbf16>
    %cst = arith.constant dense<0.000000e+00> : vector<64x128xf32>
    %2 = tpu.matmul %0, %1, %cst {dimension_numbers = #tpu.dot_dimension_numbers<[1], [0], [0], [1], [0, 0, 1, 1], [], []>} : vector<64x32xbf16>, vector<32x128xbf16>, vector<64x128xf32> -> vector<64x128xf32>
    %cst_3 = arith.constant 0.000000e+00 : f32
    %3 = vector.broadcast %cst_3 : f32 to vector<64x128xf32>
    %4 = arith.maximumf %2, %3 : vector<64x128xf32>
    %5 = arith.truncf %4 : vector<64x128xf32> to vector<64x128xbf16>
    %c0_4 = arith.constant 0 : index
    %c0_5 = arith.constant 0 : index
    %6 = vector.load %arg3[%c0_4, %c0_5] : memref<64x128xbf16, #tpu.memory_space<vmem>>, vector<64x128xbf16>
    tpu.vector_store %arg3[%c0_4, %c0_5], %5 {strides = array<i32>} : memref<64x128xbf16, #tpu.memory_space<vmem>>, vector<64x128xbf16>,
    return
  }
  func.func @transform_0(%arg0: i32) -> (i32, i32) {
    %c0_i32 = arith.constant 0 : i32
    %c0_i32_0 = arith.constant 0 : i32
    return %arg0, %c0_i32 : i32, i32
  }
  func.func @transform_1(%arg0: i32) -> (i32, i32) {
    %c0_i32 = arith.constant 0 : i32
    %c0_i32_0 = arith.constant 0 : i32
    %c0_i32_1 = arith.constant 0 : i32
    return %c0_i32, %c0_i32_0 : i32, i32
  }
  func.func @transform_2(%arg0: i32) -> (i32, i32) {
    %c0_i32 = arith.constant 0 : i32
    %c0_i32_0 = arith.constant 0 : i32
    return %arg0, %c0_i32 : i32, i32
  }
}

</mosaic_0001>

<llo_original>
// kernel: tpu_custom_call.1
$region0: #{tpu_custom_call.1}
  #allocation0 [shape = 'u32[]', space=smem, size = 0x4, offset = 0x4, fixed_abs, tag = 'smem constant byte address 0x4 - core index']
  #allocation1 [shape = 'u32[144,128]{1,0:T(1,128)}', space=vmem, size = 0x12000, scoped, tag = 'internal scratch']
  %s0 = inlined_call_operand.vmem [shape: bf16[64,32], index: 0, kind: input, shape index: {}]
  %s1 = inlined_call_operand.vmem [shape: bf16[32,128], index: 1, kind: input, shape index: {}]
  %s2 = inlined_call_operand.hbm [shape: bf16[64,128], index: 2, kind: output, shape index: {}]
  %s3 = sld [smem:[#allocation0]]
  $region18: #{tpu_custom_call.1} parent=0
    _
  %s5 = ssub.s32 1, %s3
  %s6 = scalar_select 0, %s5, %s3
  $region1: #{tpu_custom_call.1} parent=0
    #allocation2 [shape = 'u8[16384]{0}', space=vmem, size = 0x4000, scoped, tag = 'output window, operand 0, single buffered']
    #allocation3 [shape = 's32[1]{0}', space=sflag, size = 0x4, scoped, tag = 'scoped memory for tpu_custom_call.1']
    %7 = vsyncpa [#allocation3], 0
    // Predicated region
    $region2: #{tpu_custom_call.1} parent=1 // pred_check
      _
    $region3: #{tpu_custom_call.1} parent=1 // pred_check_branch
      %9 = sbr.rel (0) target = $region5
    $region4: #{tpu_custom_call.1} parent=1 // pred_region
      _
    $region5: #{tpu_custom_call.1} parent=1 // pred_fallthru
      _
    // Predicated region
    $region6: #{tpu_custom_call.1} parent=1 // pred_check
      _
    $region7: #{tpu_custom_call.1} parent=1 // pred_check_branch
      %11 = sbr.rel (0) target = $region9
    $region8: #{tpu_custom_call.1} parent=1 // pred_region
      _
    $region9: #{tpu_custom_call.1} parent=1 // pred_fallthru
      _
    %v13 = vld [vmem:[%s0] sm:$0xf]
    %v14 = vld [vmem:[%s0 + $0x4] sm:$0xf]
    %v15 = vld [vmem:[%s0 + $0x8] sm:$0xf]
    %v16 = vld [vmem:[%s0 + $0xc] sm:$0xf]
    %v17 = vld [vmem:[%s0 + $0x10] sm:$0xf]
    %v18 = vld [vmem:[%s0 + $0x14] sm:$0xf]
    %v19 = vld [vmem:[%s0 + $0x18] sm:$0xf]
    %v20 = vld [vmem:[%s0 + $0x1c] sm:$0xf]
    %v21 = vld [vmem:[%s1] sm:$0xf]
    %v22 = vld [vmem:[%s1 + $0x4] sm:$0xf]
    %v23 = vld [vmem:[%s1 + $0x8] sm:$0xf]
    %v24 = vld [vmem:[%s1 + $0xc] sm:$0xf]
    %v33 = vunpack.c.l.b16 %v13
    %v34 = vunpack.c.l.b16 %v14
    %v35 = vunpack.c.l.b16 %v15
    %v36 = vunpack.c.l.b16 %v16
    %v37 = vunpack.c.l.b16 %v17
    %v38 = vunpack.c.l.b16 %v18
    %v39 = vunpack.c.l.b16 %v19
    %v40 = vunpack.c.l.b16 %v20
    %v41 = vpack.c.b16 %v34, %v33
    %v42 = vpack.c.b16 %v36, %v35
    %v43 = vpack.c.b16 %v38, %v37
    %v44 = vpack.c.b16 %v40, %v39
    %v49 = vunpack.c.l.b16 %v21
    %v50 = vunpack.c.l.b16 %v22
    %v51 = vunpack.c.l.b16 %v23
    %v52 = vunpack.c.l.b16 %v24
    %v53 = vpack.c.b16 %v50, %v49
    %v54 = vpack.c.b16 %v52, %v51
    %vm57 = vcmask 261120
    %v59 = vsel %vm57, %v41, 0
    %v62 = vsel %vm57, %v42, 0
    %v65 = vsel %vm57, %v43, 0
    %v68 = vsel %vm57, %v44, 0
    %70 = vmatprep.subr.bf16.mxu0 0
    %71 = vmatpush1.bf16.msra.mxu0 0
    %72 = vmatprep.subr.bf16.mxu0 0
    %73 = vmatpush1.bf16.msra.mxu0 0
    %74 = vmatprep.subr.bf16.mxu0 0
    %75 = vmatpush1.bf16.msra.mxu0 0
    %76 = vmatprep.subr.bf16.mxu0 0
    %77 = vmatpush1.bf16.msra.mxu0 0
    %78 = vmatprep.subr.bf16.mxu0 0
    %79 = vmatpush1.bf16.msra.mxu0 0
    %80 = vmatprep.subr.bf16.mxu0 0
    %81 = vmatpush1.bf16.msra.mxu0 0
    %82 = vmatprep.subr.bf16.mxu0 0
    %83 = vmatpush1.bf16.msra.mxu0 %v54
    %84 = vmatprep.subr.bf16.mxu0 0
    %85 = vmatpush1.bf16.msra.mxu0 %v53
    %86 = vmatprep.subr.bf16.mxu0 0
    %87 = vmatpush2.bf16.msra.mxu0 0
    %88 = vmatprep.subr.bf16.mxu0 0
    %89 = vmatpush2.bf16.msra.mxu0 0
    %90 = vmatprep.subr.bf16.mxu0 0
    %91 = vmatpush2.bf16.msra.mxu0 0
    %92 = vmatprep.subr.bf16.mxu0 0
    %93 = vmatpush2.bf16.msra.mxu0 0
    %94 = vmatprep.subr.bf16.mxu0 0
    %95 = vmatpush2.bf16.msra.mxu0 0
    %96 = vmatprep.subr.bf16.mxu0 0
    %97 = vmatpush2.bf16.msra.mxu0 0
    %98 = vmatprep.subr.bf16.mxu0 0
    %99 = vmatpush2.bf16.msra.mxu0 0
    %100 = vmatprep.subr.bf16.mxu0 0
    %101 = vmatpush2.bf16.msra.mxu0 0
    %102 = vmatprep.mubr.bf16.mxu0 0
    %103 = vmatmul.mubr.bf16.gmra.mxu0 %v59
    %v104 = vpop.f32.mrf.mxu0
    %v105 = vadd.f32 0.0, %v104
    %v106 = vpop.f32.mrf.mxu0
    %v107 = vpop.f32.mrf.mxu0
    %v108 = vadd.f32 0.0, %v107
    %v109 = vpop.f32.mrf.mxu0
    %110 = vmatprep.mubr.bf16.mxu0 0
    %111 = vmatmul.mubr.bf16.gmra.mxu0 %v62
    %v112 = vpop.f32.mrf.mxu0
    %v113 = vadd.f32 0.0, %v112
    %v114 = vpop.f32.mrf.mxu0
    %v115 = vpop.f32.mrf.mxu0
    %v116 = vadd.f32 0.0, %v115
    %v117 = vpop.f32.mrf.mxu0
    %118 = vmatprep.mubr.bf16.mxu0 0
    %119 = vmatmul.mubr.bf16.gmra.mxu0 %v65
    %v120 = vpop.f32.mrf.mxu0
    %v121 = vadd.f32 0.0, %v120
    %v122 = vpop.f32.mrf.mxu0
    %v123 = vpop.f32.mrf.mxu0
    %v124 = vadd.f32 0.0, %v123
    %v125 = vpop.f32.mrf.mxu0
    %126 = vmatprep.mubr.bf16.mxu0 0
    %127 = vmatmul.mubr.bf16.gmra.mxu0 %v68
    %v128 = vpop.f32.mrf.mxu0
    %v129 = vadd.f32 0.0, %v128
    %v130 = vpop.f32.mrf.mxu0
    %v131 = vpop.f32.mrf.mxu0
    %v132 = vadd.f32 0.0, %v131
    %v133 = vpop.f32.mrf.mxu0
    %134 = vdwg.mxu0
    %v135 = vmax.f32 %v105, 0.0
    %v136 = vmax.f32 %v108, 0.0
    %v137 = vmax.f32 %v113, 0.0
    %v138 = vmax.f32 %v116, 0.0
    %v139 = vmax.f32 %v121, 0.0
    %v140 = vmax.f32 %v124, 0.0
    %v141 = vmax.f32 %v129, 0.0
    %v142 = vmax.f32 %v132, 0.0
    %v143 = vpack.c.bf16 %v136, %v135
    %v144 = vpack.c.bf16 %v138, %v137
    %v145 = vpack.c.bf16 %v140, %v139
    %v146 = vpack.c.bf16 %v142, %v141
    %v151 = vunpack.c.l.b16 %v143
    %v152 = vunpack.c.h.b16 %v143
    %v153 = vunpack.c.l.b16 %v144
    %v154 = vunpack.c.h.b16 %v144
    %v155 = vunpack.c.l.b16 %v145
    %v156 = vunpack.c.h.b16 %v145
    %v157 = vunpack.c.l.b16 %v146
    %v158 = vunpack.c.h.b16 %v146
    %v159 = vpack.c.b16 %v151, %v151
    %v160 = vpack.c.b16 %v152, %v152
    %v161 = vpack.c.b16 %v153, %v153
    %v162 = vpack.c.b16 %v154, %v154
    %v163 = vpack.c.b16 %v155, %v155
    %v164 = vpack.c.b16 %v156, %v156
    %v165 = vpack.c.b16 %v157, %v157
    %v166 = vpack.c.b16 %v158, %v158
    %175 = vst [vmem:[#allocation2] sm:$0xf] %v159
    %176 = vst [vmem:[#allocation2 + $0x4] sm:$0xf] %v160
    %177 = vst [vmem:[#allocation2 + $0x8] sm:$0xf] %v161
    %178 = vst [vmem:[#allocation2 + $0xc] sm:$0xf] %v162
    %179 = vst [vmem:[#allocation2 + $0x10] sm:$0xf] %v163
    %180 = vst [vmem:[#allocation2 + $0x14] sm:$0xf] %v164
    %181 = vst [vmem:[#allocation2 + $0x18] sm:$0xf] %v165
    %182 = vst [vmem:[#allocation2 + $0x1c] sm:$0xf] %v166
    // Predicated region
    $region10: #{tpu_custom_call.1} parent=1 // pred_check
      _
    $region11: #{tpu_custom_call.1} parent=1 // pred_check_branch
      %184 = sbr.rel (0) target = $region13
    $region12: #{tpu_custom_call.1} parent=1 // pred_region
      %s186 = ssub.s32 512, 512
      %187 = vsyncadd [#allocation3], %s186
      %s188 = sshll.u32 [#allocation2], 4
      %s189 = int_to_ptr.vmem [resolvable:$true] %s188
      %194 = dma.vmem_to_hbm [thread:$0]  %s189, 512, %s2, [#allocation3], 64, 64, 4
    $region13: #{tpu_custom_call.1} parent=1 // pred_fallthru
      _
    // Predicated region
    $region14: #{tpu_custom_call.1} parent=1 // pred_check
      _
    $region15: #{tpu_custom_call.1} parent=1 // pred_check_branch
      %196 = sbr.rel (0) target = $region17
    $region16: #{tpu_custom_call.1} parent=1 // pred_region
      %197 = dma.done [#allocation3], 512
    $region17: #{tpu_custom_call.1} parent=1 // pred_fallthru
      _
    %198 = vsyncpa [#allocation3], 1

</llo_original>
